<compile_context>
chip_gen: v6e
topology: v6e:2x2x1
jax: 0.10.0
libtpu: 0.0.40
codegen_flags: <defaults>
</compile_context>

<pallas_src>
import functools

import jax
import jax.numpy as jnp
from jax.experimental import pallas as pl
from jax.experimental.pallas import tpu as pltpu

HIDDEN = 64      # fixed by the torch module (nn.Linear(input_size, 64))
LANE = 128       # TPU lane width


def _round_up(n, m):
    return ((n + m - 1) // m) * m


# --------------------------------------------------------------------------- #
# Kernel
# --------------------------------------------------------------------------- #
def _mlp_kernel(x_ref, w1_ref, b1_ref, w2_ref, b2_ref, out_ref):
    """One batch tile: (TB, in) @ (in, 128) -> +b1 -> relu -> (TB,128) @ (128, out_pad) -> +b2."""
    x = x_ref[...].astype(w1_ref.dtype)                       # bf16 MXU operand

    # fc1 (accumulate in f32 on the MXU)
    h = jnp.dot(x, w1_ref[...], preferred_element_type=jnp.float32)
    h = jnp.maximum(h + b1_ref[...], 0.0)                     # f32 epilogue (v5e-safe)

    # fc2
    y = jnp.dot(h.astype(w2_ref.dtype), w2_ref[...],
                preferred_element_type=jnp.float32)
    out_ref[...] = (y + b2_ref[...]).astype(out_ref.dtype)    # lane-dense full-vreg store


# --------------------------------------------------------------------------- #
# One-time parameter preparation (do NOT call per forward pass)
# --------------------------------------------------------------------------- #
def prepare_params(w1, b1, w2, b2, *, compute_dtype=jnp.bfloat16):
    """Torch-layout params -> kernel layout, done once at model construction.

    w1: (64, input_size), b1: (64,), w2: (output_size, 64), b2: (output_size,)

    Returns a dict with transposed, zero-padded, (bf16) weights:
      w1: (input_size, 128)  b1: (1, 128) f32
      w2: (128, out_pad)     b2: (1, out_pad) f32
    Zero padding keeps the math exact: padded hidden units see zero weights and
    zero bias (ReLU(0)=0), padded output columns are sliced off in the wrapper.
    """
    hidden, in_size = w1.shape
    out_size = w2.shape[0]
    assert hidden == HIDDEN and w2.shape[1] == HIDDEN

    hid_pad = _round_up(hidden, LANE)
    out_pad = _round_up(out_size, LANE)

    w1_p = jnp.zeros((in_size, hid_pad), compute_dtype)
    w1_p = w1_p.at[:, :hidden].set(jnp.asarray(w1, compute_dtype).T)
    b1_p = jnp.zeros((1, hid_pad), jnp.float32)
    b1_p = b1_p.at[0, :hidden].set(jnp.asarray(b1, jnp.float32))

    w2_p = jnp.zeros((hid_pad, out_pad), compute_dtype)
    w2_p = w2_p.at[:hidden, :out_size].set(jnp.asarray(w2, compute_dtype).T)
    b2_p = jnp.zeros((1, out_pad), jnp.float32)
    b2_p = b2_p.at[0, :out_size].set(jnp.asarray(b2, jnp.float32))

    return {
        "w1": w1_p, "b1": b1_p, "w2": w2_p, "b2": b2_p,
        "in_size": in_size, "out_size": out_size,      # plain Python ints (static)
    }


# --------------------------------------------------------------------------- #
# Forward
# --------------------------------------------------------------------------- #
def nn_forward(x, params, *, max_block_b=512):
    """x: (B, input_size) -> (B, output_size), params from prepare_params()."""
    B, in_size = x.shape
    assert in_size == params["in_size"]
    w1, b1, w2, b2 = params["w1"], params["b1"], params["w2"], params["b2"]
    hid_pad, out_pad = w1.shape[1], w2.shape[1]
    out_size = params["out_size"]

    # Batch tiling: sublane-aligned tile, pad B up to a whole number of tiles.
    tb = min(max_block_b, _round_up(B, 8))
    b_pad = _round_up(B, tb)
    x_p = x if b_pad == B else jnp.pad(x, ((0, b_pad - B), (0, 0)))
    grid = (b_pad // tb,)

    y = pl.pallas_call(
        _mlp_kernel,
        out_shape=jax.ShapeDtypeStruct((b_pad, out_pad), jnp.float32),
        grid=grid,
        in_specs=[
            pl.BlockSpec((tb, in_size), lambda i: (i, 0)),       # x tile per grid step
            pl.BlockSpec((in_size, hid_pad), lambda i: (0, 0)),  # weights: VMEM-resident
            pl.BlockSpec((1, hid_pad), lambda i: (0, 0)),
            pl.BlockSpec((hid_pad, out_pad), lambda i: (0, 0)),
            pl.BlockSpec((1, out_pad), lambda i: (0, 0)),
        ],
        out_specs=pl.BlockSpec((tb, out_pad), lambda i: (i, 0)),
        compiler_params=pltpu.CompilerParams(
            dimension_semantics=("parallel",)),                  # independent batch tiles
    )(x_p, w1, b1, w2, b2)

    return y[:B, :out_size]


# --------------------------------------------------------------------------- #
# Reference / init helpers
# --------------------------------------------------------------------------- #
def _torch_linear_init(key, out_features, in_features):
    """Deterministic init mimicking torch.nn.Linear default (uniform +- 1/sqrt(in))."""
    kw, kb = jax.random.split(key)
    bound = 1.0 / jnp.sqrt(jnp.float32(in_features))
    w = jax.random.uniform(kw, (out_features, in_features), jnp.float32, -bound, bound)
    b = jax.random.uniform(kb, (out_features,), jnp.float32, -bound, bound)
    return w, b


def reference_forward(x, w1, b1, w2, b2):
    h = jnp.maximum(x @ w1.T + b1, 0.0)
    return h @ w2.T + b2


# --------------------------------------------------------------------------- #
if __name__ == "__main__":
    input_size = 32
    output_size = 16

    key = jax.random.PRNGKey(0)
    kx1, kx2, k1, k2 = jax.random.split(key, 4)

    w1, b1 = _torch_linear_init(k1, HIDDEN, input_size)
    w2, b2 = _torch_linear_init(k2, output_size, HIDDEN)

    # One-time prep (constant across MCTS calls); bf16 MXU operands, f32 accumulate.
    params = prepare_params(w1, b1, w2, b2, compute_dtype=jnp.bfloat16)

    # Jit the wrapper so the (rare) pad/slice glue fuses around the pallas_call.
    fwd = jax.jit(functools.partial(nn_forward, params=params))
    fwd_small_tiles = jax.jit(
        functools.partial(nn_forward, params=params, max_block_b=64))

    # Case 1: small batch, single tile.
    x_a = jax.random.normal(kx1, (8, input_size), jnp.float32)
    out_a = jax.block_until_ready(fwd(x_a))
    ref_a = reference_forward(x_a, w1, b1, w2, b2)
    assert out_a.shape == (8, output_size)
    assert jnp.allclose(out_a, ref_a, atol=2e-2, rtol=2e-2), "mismatch (case 1)"

    # Case 2: larger, non-tile-multiple batch -> multi-step "parallel" grid + padding.
    x_b = jax.random.normal(kx2, (200, input_size), jnp.float32)
    out_b = jax.block_until_ready(fwd_small_tiles(x_b))
    ref_b = reference_forward(x_b, w1, b1, w2, b2)
    assert out_b.shape == (200, output_size)
    assert jnp.allclose(out_b, ref_b, atol=2e-2, rtol=2e-2), "mismatch (case 2)"

    print("KERNEL_OK")
</pallas_src>

<mosaic_0001>
module attributes {stable_mosaic.version = 11 : i64} {
  func.func @_mlp_kernel(%arg0: i32, %arg1: memref<8x32xf32, #tpu.memory_space<vmem>>, %arg2: memref<32x128xbf16, #tpu.memory_space<vmem>>, %arg3: memref<1x128xf32, #tpu.memory_space<vmem>>, %arg4: memref<128x128xbf16, #tpu.memory_space<vmem>>, %arg5: memref<1x128xf32, #tpu.memory_space<vmem>>, %arg6: memref<8x128xf32, #tpu.memory_space<vmem>>) attributes {dimension_semantics = [#tpu.dimension_semantics<parallel>], iteration_bounds = array<i64: 1>, scalar_prefetch = 0 : i64, scratch_operands = 0 : i64, tpu.core_type = #tpu.core_type<tc>, window_params = [{transform_indices = @transform_0, window_bounds = array<i64: 8, 32>}, {pipeline_mode = #tpu.pipeline_mode<synchronous>, transform_indices = @transform_1, window_bounds = array<i64: 32, 128>}, {pipeline_mode = #tpu.pipeline_mode<synchronous>, transform_indices = @transform_2, window_bounds = array<i64: 1, 128>}, {pipeline_mode = #tpu.pipeline_mode<synchronous>, transform_indices = @transform_3, window_bounds = array<i64: 128, 128>}, {pipeline_mode = #tpu.pipeline_mode<synchronous>, transform_indices = @transform_4, window_bounds = array<i64: 1, 128>}, {transform_indices = @transform_5, window_bounds = array<i64: 8, 128>}]} {
    %c0 = arith.constant 0 : index
    %c0_0 = arith.constant 0 : index
    %0 = vector.load %arg1[%c0, %c0_0] : memref<8x32xf32, #tpu.memory_space<vmem>>, vector<8x32xf32>
    %1 = arith.truncf %0 : vector<8x32xf32> to vector<8x32xbf16>
    %c0_1 = arith.constant 0 : index
    %c0_2 = arith.constant 0 : index
    %2 = vector.load %arg2[%c0_1, %c0_2] : memref<32x128xbf16, #tpu.memory_space<vmem>>, vector<32x128xbf16>
    %cst = arith.constant dense<0.000000e+00> : vector<8x128xf32>
    %3 = tpu.matmul %1, %2, %cst {dimension_numbers = #tpu.dot_dimension_numbers<[1], [0], [0], [1], [0, 0, 1, 1], [], []>} : vector<8x32xbf16>, vector<32x128xbf16>, vector<8x128xf32> -> vector<8x128xf32>
    %c0_3 = arith.constant 0 : index
    %c0_4 = arith.constant 0 : index
    %4 = vector.load %arg3[%c0_3, %c0_4] : memref<1x128xf32, #tpu.memory_space<vmem>>, vector<1x128xf32>
    %5 = vector.broadcast %4 : vector<1x128xf32> to vector<8x128xf32>
    %6 = arith.addf %3, %5 : vector<8x128xf32>
    %cst_5 = arith.constant 0.000000e+00 : f32
    %7 = vector.broadcast %cst_5 : f32 to vector<8x128xf32>
    %8 = arith.maximumf %6, %7 : vector<8x128xf32>
    %9 = arith.truncf %8 : vector<8x128xf32> to vector<8x128xbf16>
    %c0_6 = arith.constant 0 : index
    %c0_7 = arith.constant 0 : index
    %10 = vector.load %arg4[%c0_6, %c0_7] : memref<128x128xbf16, #tpu.memory_space<vmem>>, vector<128x128xbf16>
    %cst_8 = arith.constant dense<0.000000e+00> : vector<8x128xf32>
    %11 = tpu.matmul %9, %10, %cst_8 {dimension_numbers = #tpu.dot_dimension_numbers<[1], [0], [0], [1], [0, 0, 1, 1], [], []>} : vector<8x128xbf16>, vector<128x128xbf16>, vector<8x128xf32> -> vector<8x128xf32>
    %c0_9 = arith.constant 0 : index
    %c0_10 = arith.constant 0 : index
    %12 = vector.load %arg5[%c0_9, %c0_10] : memref<1x128xf32, #tpu.memory_space<vmem>>, vector<1x128xf32>
    %13 = vector.broadcast %12 : vector<1x128xf32> to vector<8x128xf32>
    %14 = arith.addf %11, %13 : vector<8x128xf32>
    %c0_11 = arith.constant 0 : index
    %c0_12 = arith.constant 0 : index
    %15 = vector.load %arg6[%c0_11, %c0_12] : memref<8x128xf32, #tpu.memory_space<vmem>>, vector<8x128xf32>
    tpu.vector_store %arg6[%c0_11, %c0_12], %14 {strides = array<i32>} : memref<8x128xf32, #tpu.memory_space<vmem>>, vector<8x128xf32>,
    return
  }
  func.func @transform_0(%arg0: i32) -> (i32, i32) {
    %c0_i32 = arith.constant 0 : i32
    %c0_i32_0 = arith.constant 0 : i32
    return %arg0, %c0_i32 : i32, i32
  }
  func.func @transform_1(%arg0: i32) -> (i32, i32) {
    %c0_i32 = arith.constant 0 : i32
    %c0_i32_0 = arith.constant 0 : i32
    %c0_i32_1 = arith.constant 0 : i32
    return %c0_i32, %c0_i32_0 : i32, i32
  }
  func.func @transform_2(%arg0: i32) -> (i32, i32) {
    %c0_i32 = arith.constant 0 : i32
    %c0_i32_0 = arith.constant 0 : i32
    %c0_i32_1 = arith.constant 0 : i32
    return %c0_i32, %c0_i32_0 : i32, i32
  }
  func.func @transform_3(%arg0: i32) -> (i32, i32) {
    %c0_i32 = arith.constant 0 : i32
    %c0_i32_0 = arith.constant 0 : i32
    %c0_i32_1 = arith.constant 0 : i32
    return %c0_i32, %c0_i32_0 : i32, i32
  }
  func.func @transform_4(%arg0: i32) -> (i32, i32) {
    %c0_i32 = arith.constant 0 : i32
    %c0_i32_0 = arith.constant 0 : i32
    %c0_i32_1 = arith.constant 0 : i32
    return %c0_i32, %c0_i32_0 : i32, i32
  }
  func.func @transform_5(%arg0: i32) -> (i32, i32) {
    %c0_i32 = arith.constant 0 : i32
    %c0_i32_0 = arith.constant 0 : i32
    return %arg0, %c0_i32 : i32, i32
  }
}

</mosaic_0001>

<llo_original>
// kernel: nn_forward.1
$region0: #{nn_forward.1}
  #allocation0 [shape = 'u32[]', space=smem, size = 0x4, offset = 0x4, fixed_abs, tag = 'smem constant byte address 0x4 - core index']
  #allocation1 [shape = 'u32[144,128]{1,0:T(1,128)}', space=vmem, size = 0x12000, scoped, tag = 'internal scratch']
  %s0 = inlined_call_operand.hbm [shape: f32[8,32], index: 0, kind: input, shape index: {}]
  %s1 = inlined_call_operand.hbm [shape: bf16[32,128], index: 1, kind: input, shape index: {}]
  %s2 = inlined_call_operand.vmem [shape: f32[1,128], index: 2, kind: input, shape index: {}]
  %s3 = inlined_call_operand.hbm [shape: bf16[128,128], index: 3, kind: input, shape index: {}]
  %s4 = inlined_call_operand.vmem [shape: f32[1,128], index: 4, kind: input, shape index: {}]
  %s5 = inlined_call_operand.hbm [shape: f32[8,128], index: 5, kind: output, shape index: {}]
  %s6 = sld [smem:[#allocation0]]
  $region42: #{nn_forward.1} parent=0
    _
  %s8 = ssub.s32 1, %s6
  %s9 = scalar_select 0, %s8, %s6
  $region1: #{nn_forward.1} parent=0
    #allocation2 [shape = 'u8[4096]{0}', space=vmem, size = 0x1000, scoped, tag = 'input window, operand 0, single buffered']
    #allocation3 [shape = 's32[1]{0}', space=sflag, size = 0x4, scoped, tag = 'scoped memory for nn_forward.1']
    #allocation4 [shape = 's32[1]{0}', space=sflag, size = 0x4, scoped, tag = 'scoped memory for nn_forward.1']
    #allocation5 [shape = 'u8[8192]{0}', space=vmem, size = 0x2000, scoped, tag = 'input window, operand 1, single buffered']
    #allocation6 [shape = 's32[1]{0}', space=sflag, size = 0x4, scoped, tag = 'scoped memory for nn_forward.1']
    #allocation7 [shape = 'u8[32768]{0}', space=vmem, size = 0x8000, scoped, tag = 'input window, operand 3, single buffered']
    #allocation8 [shape = 'u8[4096]{0}', space=vmem, size = 0x1000, scoped, tag = 'output window, operand 0, single buffered']
    %10 = vsyncpa [#allocation3], 0
    %11 = vsyncpa [#allocation6], 0
    %12 = vsyncpa [#allocation4], 0
    // Predicated region
    $region2: #{nn_forward.1} parent=1 // pred_check
      _
    $region3: #{nn_forward.1} parent=1 // pred_check_branch
      %14 = sbr.rel (0) target = $region5
    $region4: #{nn_forward.1} parent=1 // pred_region
      %s16 = ssub.s32 128, 128
      %17 = vsyncadd [#allocation3], %s16
      %s19 = sshll.u32 [#allocation2], 4
      %s20 = int_to_ptr.vmem [resolvable:$true] %s19
      %22 = dma.hbm_to_vmem [thread:$0]  %s0, 128, %s20, [#allocation3]
    $region5: #{nn_forward.1} parent=1 // pred_fallthru
      _
    // Predicated region
    $region6: #{nn_forward.1} parent=1 // pred_check
      _
    $region7: #{nn_forward.1} parent=1 // pred_check_branch
      %24 = sbr.rel (0) target = $region9
    $region8: #{nn_forward.1} parent=1 // pred_region
      %s26 = ssub.s32 256, 256
      %27 = vsyncadd [#allocation6], %s26
      %s28 = sshll.u32 [#allocation5], 4
      %s29 = int_to_ptr.vmem [resolvable:$true] %s28
      %34 = dma.hbm_to_vmem [thread:$0]  %s1, 256, %s29, [#allocation6], 64, 64, 4
    $region9: #{nn_forward.1} parent=1 // pred_fallthru
      _
    // Predicated region
    $region10: #{nn_forward.1} parent=1 // pred_check
      _
    $region11: #{nn_forward.1} parent=1 // pred_check_branch
      %36 = sbr.rel (0) target = $region13
    $region12: #{nn_forward.1} parent=1 // pred_region
      _
    $region13: #{nn_forward.1} parent=1 // pred_fallthru
      _
    // Predicated region
    $region14: #{nn_forward.1} parent=1 // pred_check
      _
    $region15: #{nn_forward.1} parent=1 // pred_check_branch
      %38 = sbr.rel (0) target = $region17
    $region16: #{nn_forward.1} parent=1 // pred_region
      %s40 = ssub.s32 1024, 1024
      %41 = vsyncadd [#allocation6], %s40
      %s42 = sshll.u32 [#allocation7], 4
      %s43 = int_to_ptr.vmem [resolvable:$true] %s42
      %48 = dma.hbm_to_vmem [thread:$0]  %s3, 1024, %s43, [#allocation6], 64, 64, 4
    $region17: #{nn_forward.1} parent=1 // pred_fallthru
      _
    // Predicated region
    $region18: #{nn_forward.1} parent=1 // pred_check
      _
    $region19: #{nn_forward.1} parent=1 // pred_check_branch
      %50 = sbr.rel (0) target = $region21
    $region20: #{nn_forward.1} parent=1 // pred_region
      _
    $region21: #{nn_forward.1} parent=1 // pred_fallthru
      _
    // Predicated region
    $region22: #{nn_forward.1} parent=1 // pred_check
      _
    $region23: #{nn_forward.1} parent=1 // pred_check_branch
      %52 = sbr.rel (0) target = $region25
    $region24: #{nn_forward.1} parent=1 // pred_region
      %53 = dma.done [#allocation3], 128
    $region25: #{nn_forward.1} parent=1 // pred_fallthru
      _
    // Predicated region
    $region26: #{nn_forward.1} parent=1 // pred_check
      _
    $region27: #{nn_forward.1} parent=1 // pred_check_branch
      %55 = sbr.rel (0) target = $region29
    $region28: #{nn_forward.1} parent=1 // pred_region
      %56 = dma.done [#allocation6], 256
    $region29: #{nn_forward.1} parent=1 // pred_fallthru
      _
    // Predicated region
    $region30: #{nn_forward.1} parent=1 // pred_check
      _
    $region31: #{nn_forward.1} parent=1 // pred_check_branch
      %58 = sbr.rel (0) target = $region33
    $region32: #{nn_forward.1} parent=1 // pred_region
      %59 = dma.done [#allocation6], 1024
    $region33: #{nn_forward.1} parent=1 // pred_fallthru
      _
    %v61 = vld [vmem:[#allocation2] sm:$0xff]
    %v62 = vpack.c.bf16 %v61, %v61
    %v63 = vld [vmem:[#allocation5] sm:$0xf]
    %v64 = vld [vmem:[#allocation5 + $0x4] sm:$0xf]
    %v65 = vld [vmem:[#allocation5 + $0x8] sm:$0xf]
    %v66 = vld [vmem:[#allocation5 + $0xc] sm:$0xf]
    %v67 = vld [vmem:[%s2] sm:$0x1]
    %v69 = vlaneseq
    %v70 = vshrl.u32 %v69, 7
    %v71 = vsub.s32 0, %v70
    %v72 = vrot.slane %v67, %v71
    %v78 = vunpack.c.l.b16 %v63
    %v79 = vunpack.c.l.b16 %v64
    %v80 = vunpack.c.l.b16 %v65
    %v81 = vunpack.c.l.b16 %v66
    %v82 = vpack.c.b16 %v79, %v78
    %v83 = vpack.c.b16 %v81, %v80
    %vm86 = vcmask 261120
    %v88 = vsel %vm86, %v62, 0
    %90 = vmatprep.subr.bf16.mxu0 0
    %91 = vmatpush1.bf16.msra.mxu0 0
    %92 = vmatprep.subr.bf16.mxu0 0
    %93 = vmatpush1.bf16.msra.mxu0 0
    %94 = vmatprep.subr.bf16.mxu0 0
    %95 = vmatpush1.bf16.msra.mxu0 0
    %96 = vmatprep.subr.bf16.mxu0 0
    %97 = vmatpush1.bf16.msra.mxu0 0
    %98 = vmatprep.subr.bf16.mxu0 0
    %99 = vmatpush1.bf16.msra.mxu0 0
    %100 = vmatprep.subr.bf16.mxu0 0
    %101 = vmatpush1.bf16.msra.mxu0 0
    %102 = vmatprep.subr.bf16.mxu0 0
    %103 = vmatpush1.bf16.msra.mxu0 %v83
    %104 = vmatprep.subr.bf16.mxu0 0
    %105 = vmatpush1.bf16.msra.mxu0 %v82
    %106 = vmatprep.subr.bf16.mxu0 0
    %107 = vmatpush2.bf16.msra.mxu0 0
    %108 = vmatprep.subr.bf16.mxu0 0
    %109 = vmatpush2.bf16.msra.mxu0 0
    %110 = vmatprep.subr.bf16.mxu0 0
    %111 = vmatpush2.bf16.msra.mxu0 0
    %112 = vmatprep.subr.bf16.mxu0 0
    %113 = vmatpush2.bf16.msra.mxu0 0
    %114 = vmatprep.subr.bf16.mxu0 0
    %115 = vmatpush2.bf16.msra.mxu0 0
    %116 = vmatprep.subr.bf16.mxu0 0
    %117 = vmatpush2.bf16.msra.mxu0 0
    %118 = vmatprep.subr.bf16.mxu0 0
    %119 = vmatpush2.bf16.msra.mxu0 0
    %120 = vmatprep.subr.bf16.mxu0 0
    %121 = vmatpush2.bf16.msra.mxu0 0
    %122 = vmatprep.mubr.bf16.mxu0 0
    %123 = vmatmul.mubr.bf16.gmra.mxu0 %v88
    %v124 = vpop.f32.mrf.mxu0
    %v125 = vadd.f32 %v72, %v124
    %v126 = vpop.f32.mrf.mxu0
    %v127 = vpop.f32.mrf.mxu0
    %v128 = vpop.f32.mrf.mxu0
    %129 = vdwg.mxu0
    %v130 = vmax.f32 %v125, 0.0
    %v131 = vpack.c.bf16 %v130, %v130
    %v132 = vld [vmem:[#allocation7] sm:$0xf]
    %v133 = vld [vmem:[#allocation7 + $0x4] sm:$0xf]
    %v134 = vld [vmem:[#allocation7 + $0x8] sm:$0xf]
    %v135 = vld [vmem:[#allocation7 + $0xc] sm:$0xf]
    %v136 = vld [vmem:[#allocation7 + $0x10] sm:$0xf]
    %v137 = vld [vmem:[#allocation7 + $0x14] sm:$0xf]
    %v138 = vld [vmem:[#allocation7 + $0x18] sm:$0xf]
    %v139 = vld [vmem:[#allocation7 + $0x1c] sm:$0xf]
    %v140 = vld [vmem:[#allocation7 + $0x20] sm:$0xf]
    %v141 = vld [vmem:[#allocation7 + $0x24] sm:$0xf]
    %v142 = vld [vmem:[#allocation7 + $0x28] sm:$0xf]
    %v143 = vld [vmem:[#allocation7 + $0x2c] sm:$0xf]
    %v144 = vld [vmem:[#allocation7 + $0x30] sm:$0xf]
    %v145 = vld [vmem:[#allocation7 + $0x34] sm:$0xf]
    %v146 = vld [vmem:[#allocation7 + $0x38] sm:$0xf]
    %v147 = vld [vmem:[#allocation7 + $0x3c] sm:$0xf]
    %v148 = vld [vmem:[%s4] sm:$0x1]
    %v150 = vlaneseq
    %v151 = vshrl.u32 %v150, 7
    %v152 = vsub.s32 0, %v151
    %v153 = vrot.slane %v148, %v152
    %v171 = vunpack.c.l.b16 %v132
    %v172 = vunpack.c.l.b16 %v133
    %v173 = vunpack.c.l.b16 %v134
    %v174 = vunpack.c.l.b16 %v135
    %v175 = vunpack.c.l.b16 %v136
    %v176 = vunpack.c.l.b16 %v137
    %v177 = vunpack.c.l.b16 %v138
    %v178 = vunpack.c.l.b16 %v139
    %v179 = vunpack.c.l.b16 %v140
    %v180 = vunpack.c.l.b16 %v141
    %v181 = vunpack.c.l.b16 %v142
    %v182 = vunpack.c.l.b16 %v143
    %v183 = vunpack.c.l.b16 %v144
    %v184 = vunpack.c.l.b16 %v145
    %v185 = vunpack.c.l.b16 %v146
    %v186 = vunpack.c.l.b16 %v147
    %v187 = vpack.c.b16 %v172, %v171
    %v188 = vpack.c.b16 %v174, %v173
    %v189 = vpack.c.b16 %v176, %v175
    %v190 = vpack.c.b16 %v178, %v177
    %v191 = vpack.c.b16 %v180, %v179
    %v192 = vpack.c.b16 %v182, %v181
    %v193 = vpack.c.b16 %v184, %v183
    %v194 = vpack.c.b16 %v186, %v185
    %203 = vmatprep.subr.bf16.mxu0 0
    %204 = vmatpush1.bf16.msra.mxu0 %v194
    %205 = vmatprep.subr.bf16.mxu0 0
    %206 = vmatpush1.bf16.msra.mxu0 %v193
    %207 = vmatprep.subr.bf16.mxu0 0
    %208 = vmatpush1.bf16.msra.mxu0 %v192
    %209 = vmatprep.subr.bf16.mxu0 0
    %210 = vmatpush1.bf16.msra.mxu0 %v191
    %211 = vmatprep.subr.bf16.mxu0 0
    %212 = vmatpush1.bf16.msra.mxu0 %v190
    %213 = vmatprep.subr.bf16.mxu0 0
    %214 = vmatpush1.bf16.msra.mxu0 %v189
    %215 = vmatprep.subr.bf16.mxu0 0
    %216 = vmatpush1.bf16.msra.mxu0 %v188
    %217 = vmatprep.subr.bf16.mxu0 0
    %218 = vmatpush1.bf16.msra.mxu0 %v187
    %219 = vmatprep.subr.bf16.mxu0 0
    %220 = vmatpush2.bf16.msra.mxu0 0
    %221 = vmatprep.subr.bf16.mxu0 0
    %222 = vmatpush2.bf16.msra.mxu0 0
    %223 = vmatprep.subr.bf16.mxu0 0
    %224 = vmatpush2.bf16.msra.mxu0 0
    %225 = vmatprep.subr.bf16.mxu0 0
    %226 = vmatpush2.bf16.msra.mxu0 0
    %227 = vmatprep.subr.bf16.mxu0 0
    %228 = vmatpush2.bf16.msra.mxu0 0
    %229 = vmatprep.subr.bf16.mxu0 0
    %230 = vmatpush2.bf16.msra.mxu0 0
    %231 = vmatprep.subr.bf16.mxu0 0
    %232 = vmatpush2.bf16.msra.mxu0 0
    %233 = vmatprep.subr.bf16.mxu0 0
    %234 = vmatpush2.bf16.msra.mxu0 0
    %235 = vmatprep.mubr.bf16.mxu0 0
    %236 = vmatmul.mubr.bf16.gmra.mxu0 %v131
    %v237 = vpop.f32.mrf.mxu0
    %v238 = vadd.f32 %v153, %v237
    %v239 = vpop.f32.mrf.mxu0
    %v240 = vpop.f32.mrf.mxu0
    %v241 = vpop.f32.mrf.mxu0
    %242 = vdwg.mxu0
    %243 = vst [vmem:[#allocation8] sm:$0xff] %v238
    // Predicated region
    $region34: #{nn_forward.1} parent=1 // pred_check
      _
    $region35: #{nn_forward.1} parent=1 // pred_check_branch
      %245 = sbr.rel (0) target = $region37
    $region36: #{nn_forward.1} parent=1 // pred_region
      %s247 = ssub.s32 128, 128
      %248 = vsyncadd [#allocation4], %s247
      %s250 = sshll.u32 [#allocation8], 4
      %s251 = int_to_ptr.vmem [resolvable:$true] %s250
      %253 = dma.vmem_to_hbm [thread:$0]  %s251, 128, %s5, [#allocation4]
    $region37: #{nn_forward.1} parent=1 // pred_fallthru
      _
    // Predicated region
    $region38: #{nn_forward.1} parent=1 // pred_check
      _
    $region39: #{nn_forward.1} parent=1 // pred_check_branch
      %255 = sbr.rel (0) target = $region41
    $region40: #{nn_forward.1} parent=1 // pred_region
      %256 = dma.done [#allocation4], 128
    $region41: #{nn_forward.1} parent=1 // pred_fallthru
      _
    %257 = vsyncpa [#allocation3], 1
    %258 = vsyncpa [#allocation6], 1
    %259 = vsyncpa [#allocation4], 1

</llo_original>
